<compile_context>
chip_gen: v7x
topology: tpu7x:2x2x1
jax: 0.10.0
libtpu: 0.0.40
codegen_flags: <defaults>
</compile_context>

<pallas_src>
import jax
import jax.numpy as jnp
from jax import lax
from jax.experimental import pallas as pl
from jax.experimental.pallas import tpu as pltpu


def linear_kernel(x_ref, w_ref, b_ref, o_ref):
    # x_ref: [TB, IN], w_ref: [OUT, IN] (PyTorch layout, no wrapper transpose),
    # b_ref: [1, OUT], o_ref: [TB, OUT]
    acc = lax.dot_general(
        x_ref[...],
        w_ref[...],
        dimension_numbers=(((1,), (1,)), ((), ())),  # contract IN with IN
        preferred_element_type=jnp.float32,
    )
    # f32 accumulate + single final cast (cheap on all of v5e/v6e/v7x).
    o_ref[...] = (acc + b_ref[...]).astype(o_ref.dtype)


def _pick_batch_tile(B, target=512):
    """Largest batch tile <= target that divides B (multiple of 8 when tiled)."""
    if B <= target:
        return B
    for tb in (target, 256, 128, 64, 32, 16, 8):
        if B % tb == 0:
            return tb
    return target  # ragged last block; Pallas masks the out-of-range stores


def module_forward(x, weight, bias, *, target_tile=512):
    """Equivalent of Module.forward(X) == self.net(X) with net = nn.Linear.

    x:      [B, IN]   float32
    weight: [OUT, IN] float32  (PyTorch Linear layout — NOT transposed here)
    bias:   [OUT]     float32
    returns [B, OUT]  float32
    """
    B, IN = x.shape
    OUT = weight.shape[0]
    b2d = bias.reshape(1, OUT)  # 2-D so it lives as a TPU-friendly VMEM block

    TB = _pick_batch_tile(B, target_tile)
    grid = (pl.cdiv(B, TB),)

    return pl.pallas_call(
        linear_kernel,
        out_shape=jax.ShapeDtypeStruct((B, OUT), x.dtype),
        grid_spec=pltpu.PrefetchScalarGridSpec(
            num_scalar_prefetch=0,
            grid=grid,
            in_specs=[
                # x tile follows the batch grid step
                pl.BlockSpec((TB, IN), lambda i: (i, 0)),
                # weight resident in VMEM for the whole call (grid-invariant)
                pl.BlockSpec((OUT, IN), lambda i: (0, 0)),
                # bias resident in VMEM for the whole call (grid-invariant)
                pl.BlockSpec((1, OUT), lambda i: (0, 0)),
            ],
            out_specs=pl.BlockSpec((TB, OUT), lambda i: (i, 0)),
        ),
        compiler_params=pltpu.CompilerParams(
            # Batch tiles are independent -> shard across TCs on v7x megacore.
            dimension_semantics=("parallel",),
        ),
    )(x, weight, b2d)


if __name__ == "__main__":
    # Shapes consistent with the implied forward: hidden=32; a modest batch
    # (1024 rows, TB=512 -> grid=(2,)) so the batch-tiled pipeline is exercised.
    B, IN, OUT = 1024, 32, 32

    key = jax.random.PRNGKey(0)
    kx, kw, kb = jax.random.split(key, 3)

    x = jax.random.normal(kx, (B, IN), dtype=jnp.float32)
    # Deterministic parameter init (mimic PyTorch Linear's uniform bound 1/sqrt(IN)).
    bound = 1.0 / jnp.sqrt(jnp.float32(IN))
    weight = jax.random.uniform(kw, (OUT, IN), jnp.float32, -bound, bound)
    bias = jax.random.uniform(kb, (OUT,), jnp.float32, -bound, bound)

    y = module_forward(x, weight, bias)
    y = jax.block_until_ready(y)

    # Reference check in plain JAX (same semantics as nn.Linear forward).
    y_ref = x @ weight.T + bias
    assert y.shape == (B, OUT)
    assert jnp.allclose(y, y_ref, atol=1e-5, rtol=1e-5), "mismatch vs reference"

    print("KERNEL_OK")
</pallas_src>

<mosaic_0001>
module attributes {stable_mosaic.version = 11 : i64} {
  func.func @linear_kernel(%arg0: i32, %arg1: memref<512x32xf32, #tpu.memory_space<vmem>>, %arg2: memref<32x32xf32, #tpu.memory_space<vmem>>, %arg3: memref<1x32xf32, #tpu.memory_space<vmem>>, %arg4: memref<512x32xf32, #tpu.memory_space<vmem>>) attributes {dimension_semantics = [#tpu.dimension_semantics<parallel>], iteration_bounds = array<i64: 2>, scalar_prefetch = 0 : i64, scratch_operands = 0 : i64, tpu.core_type = #tpu.core_type<tc>, window_params = [{transform_indices = @transform_0, window_bounds = array<i64: 512, 32>}, {pipeline_mode = #tpu.pipeline_mode<synchronous>, transform_indices = @transform_1, window_bounds = array<i64: 32, 32>}, {pipeline_mode = #tpu.pipeline_mode<synchronous>, transform_indices = @transform_2, window_bounds = array<i64: 1, 32>}, {transform_indices = @transform_3, window_bounds = array<i64: 512, 32>}]} {
    %c0 = arith.constant 0 : index
    %c0_0 = arith.constant 0 : index
    %0 = vector.load %arg1[%c0, %c0_0] : memref<512x32xf32, #tpu.memory_space<vmem>>, vector<512x32xf32>
    %c0_1 = arith.constant 0 : index
    %c0_2 = arith.constant 0 : index
    %1 = vector.load %arg2[%c0_1, %c0_2] : memref<32x32xf32, #tpu.memory_space<vmem>>, vector<32x32xf32>
    %cst = arith.constant dense<0.000000e+00> : vector<512x32xf32>
    %2 = tpu.matmul %0, %1, %cst {dimension_numbers = #tpu.dot_dimension_numbers<[1], [1], [0], [0], [0, 0, 1, 0], [], []>} : vector<512x32xf32>, vector<32x32xf32>, vector<512x32xf32> -> vector<512x32xf32>
    %c0_3 = arith.constant 0 : index
    %c0_4 = arith.constant 0 : index
    %3 = vector.load %arg3[%c0_3, %c0_4] : memref<1x32xf32, #tpu.memory_space<vmem>>, vector<1x32xf32>
    %4 = vector.broadcast %3 : vector<1x32xf32> to vector<512x32xf32>
    %5 = arith.addf %2, %4 : vector<512x32xf32>
    %c0_5 = arith.constant 0 : index
    %c0_6 = arith.constant 0 : index
    %6 = vector.load %arg4[%c0_5, %c0_6] : memref<512x32xf32, #tpu.memory_space<vmem>>, vector<512x32xf32>
    tpu.vector_store %arg4[%c0_5, %c0_6], %5 {strides = array<i32>} : memref<512x32xf32, #tpu.memory_space<vmem>>, vector<512x32xf32>,
    return
  }
  func.func @transform_0(%arg0: i32) -> (i32, i32) {
    %c0_i32 = arith.constant 0 : i32
    %c0_i32_0 = arith.constant 0 : i32
    return %arg0, %c0_i32 : i32, i32
  }
  func.func @transform_1(%arg0: i32) -> (i32, i32) {
    %c0_i32 = arith.constant 0 : i32
    %c0_i32_0 = arith.constant 0 : i32
    %c0_i32_1 = arith.constant 0 : i32
    return %c0_i32, %c0_i32_0 : i32, i32
  }
  func.func @transform_2(%arg0: i32) -> (i32, i32) {
    %c0_i32 = arith.constant 0 : i32
    %c0_i32_0 = arith.constant 0 : i32
    %c0_i32_1 = arith.constant 0 : i32
    return %c0_i32, %c0_i32_0 : i32, i32
  }
  func.func @transform_3(%arg0: i32) -> (i32, i32) {
    %c0_i32 = arith.constant 0 : i32
    %c0_i32_0 = arith.constant 0 : i32
    return %arg0, %c0_i32 : i32, i32
  }
}

</mosaic_0001>

<llo_original>
// kernel: tpu_custom_call.1
$region0: #{tpu_custom_call.1}
  #allocation0 [shape = 'u32[]', space=smem, size = 0x4, offset = 0x4, fixed_abs, tag = 'smem constant byte address 0x4 - core index']
  #allocation1 [shape = 'u32[144,128]{1,0:T(1,128)}', space=vmem, size = 0x12000, scoped, tag = 'internal scratch']
  %s0 = inlined_call_operand.vmem [shape: f32[1024,32], index: 0, kind: input, shape index: {}]
  %s1 = inlined_call_operand.vmem [shape: f32[32,32], index: 1, kind: input, shape index: {}]
  %s2 = inlined_call_operand.vmem [shape: f32[1,32], index: 2, kind: input, shape index: {}]
  %s3 = inlined_call_operand.vmem [shape: f32[1024,32], index: 3, kind: output, shape index: {}]
  %s4 = sld [smem:[#allocation0]]
  $region45: #{tpu_custom_call.1} parent=0
    _
  %s6 = ssub.s32 1, %s4
  %s7 = scalar_select 0, %s6, %s4
  loop: start=0, step=1, limit=4
  $region2: #{tpu_custom_call.1} parent=0 // loop_pre_header
    _
  $region3: #{tpu_custom_call.1} parent=0 // loop_header
    %s9 = sphi 0, %s13
    %p10 = scmp.ge.s32.totalorder %s9, 4
    %s19 = sphi 0, %s21
    %s22 = sphi 0, %s19
    %s23 = sphi 0, %s22
    %s39 = sphi 0, %s23
    %s43 = sphi 0, %s43
    %s45 = sphi 0, %s43
    %s46 = sphi 0, %s45
    %s60 = sphi 0, %s46
    %s64 = sphi 0, %s64
    %s66 = sphi 0, %s64
    %s67 = sphi 0, %s66
    %s81 = sphi 0, %s67
    %s87 = sphi 0, %s89
    %s90 = sphi 0, %s87
    %s91 = sphi 0, %s90
    %s107 = sphi 0, %s91
  $region4: #{tpu_custom_call.1} parent=0 // loop_header_branch
    %12 = sbr.rel (%p10) target = $region8
  $region5: #{tpu_custom_call.1} parent=0 // loop_body
    %s14 = ssub.s32 %s9, 1
    %s15 = ssub.s32 %s9, 2
    %s16 = sadd.s32 %s9, 1
    %s17 = ssub.s32 %s9, %s16
    %p18 = scmp.eq.s32.totalorder %s17, 0
    %s20 = sadd.s32 %s19, 1
    %s21 = scalar_select %p18, %s19, %s20
    %p24 = pneg %p18
    %p25 = scmp.eq.s32.totalorder %s9, 1
    %p26 = por %p24, %p25
    %p27 = scmp.ne.s32.totalorder %s19, %s22
    %p28 = scmp.eq.s32.totalorder %s9, 0
    %p29 = por %p27, %p28
    %p30 = scmp.ne.s32.totalorder %s19, %s22
    %p31 = scmp.eq.s32.totalorder %s14, 1
    %p32 = por %p30, %p31
    %p33 = scmp.ne.s32.totalorder %s22, %s23
    %p34 = scmp.eq.s32.totalorder %s14, 0
    %p35 = por %p33, %p34
    %p36 = scmp.ne.s32.totalorder %s22, %s23
    %p37 = scmp.eq.s32.totalorder %s15, 1
    %p38 = por %p36, %p37
    %p40 = scmp.ne.s32.totalorder %s23, %s39
    %p41 = scmp.eq.s32.totalorder %s15, 0
    %p42 = por %p40, %p41
    %s44 = sadd.s32 %s43, 1
    %p47 = scmp.eq.s32.totalorder %s9, 1
    %p48 = scmp.ne.s32.totalorder %s43, %s45
    %p49 = scmp.eq.s32.totalorder %s9, 0
    %p50 = por %p48, %p49
    %p51 = scmp.ne.s32.totalorder %s43, %s45
    %p52 = scmp.eq.s32.totalorder %s14, 1
    %p53 = por %p51, %p52
    %p54 = scmp.ne.s32.totalorder %s45, %s46
    %p55 = scmp.eq.s32.totalorder %s14, 0
    %p56 = por %p54, %p55
    %p57 = scmp.ne.s32.totalorder %s45, %s46
    %p58 = scmp.eq.s32.totalorder %s15, 1
    %p59 = por %p57, %p58
    %p61 = scmp.ne.s32.totalorder %s46, %s60
    %p62 = scmp.eq.s32.totalorder %s15, 0
    %p63 = por %p61, %p62
    %s65 = sadd.s32 %s64, 1
    %p68 = scmp.eq.s32.totalorder %s9, 1
    %p69 = scmp.ne.s32.totalorder %s64, %s66
    %p70 = scmp.eq.s32.totalorder %s9, 0
    %p71 = por %p69, %p70
    %p72 = scmp.ne.s32.totalorder %s64, %s66
    %p73 = scmp.eq.s32.totalorder %s14, 1
    %p74 = por %p72, %p73
    %p75 = scmp.ne.s32.totalorder %s66, %s67
    %p76 = scmp.eq.s32.totalorder %s14, 0
    %p77 = por %p75, %p76
    %p78 = scmp.ne.s32.totalorder %s66, %s67
    %p79 = scmp.eq.s32.totalorder %s15, 1
    %p80 = por %p78, %p79
    %p82 = scmp.ne.s32.totalorder %s67, %s81
    %p83 = scmp.eq.s32.totalorder %s15, 0
    %p84 = por %p82, %p83
    %s85 = ssub.s32 %s9, %s16
    %p86 = scmp.eq.s32.totalorder %s85, 0
    %s88 = sadd.s32 %s87, 1
    %s89 = scalar_select %p86, %s87, %s88
    %p92 = pneg %p86
    %p93 = scmp.eq.s32.totalorder %s9, 1
    %p94 = por %p92, %p93
    %p95 = scmp.ne.s32.totalorder %s87, %s90
    %p96 = scmp.eq.s32.totalorder %s9, 0
    %p97 = por %p95, %p96
    %p98 = scmp.ne.s32.totalorder %s87, %s90
    %p99 = scmp.eq.s32.totalorder %s14, 1
    %p100 = por %p98, %p99
    %p101 = scmp.ne.s32.totalorder %s90, %s91
    %p102 = scmp.eq.s32.totalorder %s14, 0
    %p103 = por %p101, %p102
    %p104 = scmp.ne.s32.totalorder %s90, %s91
    %p105 = scmp.eq.s32.totalorder %s15, 1
    %p106 = por %p104, %p105
    %p108 = scmp.ne.s32.totalorder %s91, %s107
    %p109 = scmp.eq.s32.totalorder %s15, 0
    %p110 = por %p108, %p109
    %p111 = scmp.le.s32.totalorder 1, %s9
    %p112 = scmp.lt.s32.totalorder %s9, 3
    %p113 = pnand %p111, %p112
    %p114 = pneg %p113
    // Predicated region
    $region9: #{tpu_custom_call.1} parent=5 // pred_check
      _
    $region10: #{tpu_custom_call.1} parent=5 // pred_check_branch
      %116 = sbr.rel (%p113) target = $region12
    $region11: #{tpu_custom_call.1} parent=5 // pred_region
      %s117 = ssub.s32 %s9, 1
      // Predicated region
      $region13: #{tpu_custom_call.1} parent=11 // pred_check
        %p118 = pneg %p56
      $region14: #{tpu_custom_call.1} parent=11 // pred_check_branch
        %120 = sbr.rel (%p118) target = $region16
      $region15: #{tpu_custom_call.1} parent=11 // pred_region
        _
      $region16: #{tpu_custom_call.1} parent=11 // pred_fallthru
        _
      // Predicated region
      $region17: #{tpu_custom_call.1} parent=11 // pred_check
        %p121 = pneg %p77
      $region18: #{tpu_custom_call.1} parent=11 // pred_check_branch
        %123 = sbr.rel (%p121) target = $region20
      $region19: #{tpu_custom_call.1} parent=11 // pred_region
        _
      $region20: #{tpu_custom_call.1} parent=11 // pred_fallthru
        _
    $region12: #{tpu_custom_call.1} parent=5 // pred_fallthru
      _
    %p124 = scmp.lt.s32.totalorder %s9, 2
    // Predicated region
    $region21: #{tpu_custom_call.1} parent=5 // pred_check
      %p125 = pneg %p124
    $region22: #{tpu_custom_call.1} parent=5 // pred_check_branch
      %127 = sbr.rel (%p125) target = $region24
    $region23: #{tpu_custom_call.1} parent=5 // pred_region
      // Predicated region
      $region25: #{tpu_custom_call.1} parent=23 // pred_check
        %p128 = pneg %p29
      $region26: #{tpu_custom_call.1} parent=23 // pred_check_branch
        %130 = sbr.rel (%p128) target = $region28
      $region27: #{tpu_custom_call.1} parent=23 // pred_region
        %s131 = smul.u32 64, %s9
        %p132 = scmp.lt.s32.totalorder %s131, 127
        %s133 = scalar_select %p132, %s131, 127
        %s134 = smul.addr %s133, 8
        %s135 = scalar_lea.vmem %s0, %s134
        %s136 = smul.u32 64, %s9
      $region28: #{tpu_custom_call.1} parent=23 // pred_fallthru
        _
    $region24: #{tpu_custom_call.1} parent=5 // pred_fallthru
      _
    %p137 = scmp.le.s32.totalorder 1, %s9
    %p138 = scmp.lt.s32.totalorder %s9, 3
    %p139 = pnand %p137, %p138
    %p140 = pneg %p139
    // Predicated region
    $region29: #{tpu_custom_call.1} parent=5 // pred_check
      _
    $region30: #{tpu_custom_call.1} parent=5 // pred_check_branch
      %142 = sbr.rel (%p139) target = $region32
    $region31: #{tpu_custom_call.1} parent=5 // pred_region
      %s143 = ssub.s32 %s9, 1
      %s144 = smul.u32 64, %s14
      %p145 = scmp.lt.s32.totalorder %s144, 127
      %s146 = scalar_select %p145, %s144, 127
      %s147 = smul.addr %s146, 8
      %s148 = scalar_lea.vmem %s0, %s147
      %p149 = pneg %p35
      %p150 = pneg %p32
      %p151 = pneg %p56
      %p152 = pneg %p53
      %p153 = pneg %p77
      %p154 = pneg %p74
      %p155 = pneg %p103
      %p156 = pneg %p100
      %s157 = smul.u32 64, %s14
      %p158 = scmp.lt.s32.totalorder %s157, 127
      %s159 = scalar_select %p158, %s157, 127
      %s160 = smul.addr %s159, 8
      %s161 = scalar_lea.vmem %s3, %s160
      %s162 = smul.u32 64, %s14
      %p163 = scmp.lt.s32.totalorder %s162, 127
      %s164 = scalar_select %p163, %s162, 127
      %s165 = smul.addr %s164, 8
      %s166 = scalar_lea.vmem %s0, %s165
      %s167 = smul.u32 64, %s14
      %s168 = smul.u32 64, %s14
      %p169 = scmp.lt.s32.totalorder %s168, 127
      %s170 = scalar_select %p169, %s168, 127
      %s171 = smul.addr %s170, 8
      %s172 = scalar_lea.vmem %s3, %s171
      %s173 = smul.u32 64, %s14
      %v174 = vld [vmem:[%s166] sm:$0xff]
      %v175 = vld [vmem:[%s166 + $0x8] sm:$0xff]
      %v176 = vld [vmem:[%s166 + $0x10] sm:$0xff]
      %v177 = vld [vmem:[%s166 + $0x18] sm:$0xff]
      %v178 = vld [vmem:[%s166 + $0x20] sm:$0xff]
      %v179 = vld [vmem:[%s166 + $0x28] sm:$0xff]
      %v180 = vld [vmem:[%s166 + $0x30] sm:$0xff]
      %v181 = vld [vmem:[%s166 + $0x38] sm:$0xff]
      %v182 = vld [vmem:[%s166 + $0x40] sm:$0xff]
      %v183 = vld [vmem:[%s166 + $0x48] sm:$0xff]
      %v184 = vld [vmem:[%s166 + $0x50] sm:$0xff]
      %v185 = vld [vmem:[%s166 + $0x58] sm:$0xff]
      %v186 = vld [vmem:[%s166 + $0x60] sm:$0xff]
      %v187 = vld [vmem:[%s166 + $0x68] sm:$0xff]
      %v188 = vld [vmem:[%s166 + $0x70] sm:$0xff]
      %v189 = vld [vmem:[%s166 + $0x78] sm:$0xff]
      %v190 = vld [vmem:[%s166 + $0x80] sm:$0xff]
      %v191 = vld [vmem:[%s166 + $0x88] sm:$0xff]
      %v192 = vld [vmem:[%s166 + $0x90] sm:$0xff]
      %v193 = vld [vmem:[%s166 + $0x98] sm:$0xff]
      %v194 = vld [vmem:[%s166 + $0xa0] sm:$0xff]
      %v195 = vld [vmem:[%s166 + $0xa8] sm:$0xff]
      %v196 = vld [vmem:[%s166 + $0xb0] sm:$0xff]
      %v197 = vld [vmem:[%s166 + $0xb8] sm:$0xff]
      %v198 = vld [vmem:[%s166 + $0xc0] sm:$0xff]
      %v199 = vld [vmem:[%s166 + $0xc8] sm:$0xff]
      %v200 = vld [vmem:[%s166 + $0xd0] sm:$0xff]
      %v201 = vld [vmem:[%s166 + $0xd8] sm:$0xff]
      %v202 = vld [vmem:[%s166 + $0xe0] sm:$0xff]
      %v203 = vld [vmem:[%s166 + $0xe8] sm:$0xff]
      %v204 = vld [vmem:[%s166 + $0xf0] sm:$0xff]
      %v205 = vld [vmem:[%s166 + $0xf8] sm:$0xff]
      %v206 = vld [vmem:[%s166 + $0x100] sm:$0xff]
      %v207 = vld [vmem:[%s166 + $0x108] sm:$0xff]
      %v208 = vld [vmem:[%s166 + $0x110] sm:$0xff]
      %v209 = vld [vmem:[%s166 + $0x118] sm:$0xff]
      %v210 = vld [vmem:[%s166 + $0x120] sm:$0xff]
      %v211 = vld [vmem:[%s166 + $0x128] sm:$0xff]
      %v212 = vld [vmem:[%s166 + $0x130] sm:$0xff]
      %v213 = vld [vmem:[%s166 + $0x138] sm:$0xff]
      %v214 = vld [vmem:[%s166 + $0x140] sm:$0xff]
      %v215 = vld [vmem:[%s166 + $0x148] sm:$0xff]
      %v216 = vld [vmem:[%s166 + $0x150] sm:$0xff]
      %v217 = vld [vmem:[%s166 + $0x158] sm:$0xff]
      %v218 = vld [vmem:[%s166 + $0x160] sm:$0xff]
      %v219 = vld [vmem:[%s166 + $0x168] sm:$0xff]
      %v220 = vld [vmem:[%s166 + $0x170] sm:$0xff]
      %v221 = vld [vmem:[%s166 + $0x178] sm:$0xff]
      %v222 = vld [vmem:[%s166 + $0x180] sm:$0xff]
      %v223 = vld [vmem:[%s166 + $0x188] sm:$0xff]
      %v224 = vld [vmem:[%s166 + $0x190] sm:$0xff]
      %v225 = vld [vmem:[%s166 + $0x198] sm:$0xff]
      %v226 = vld [vmem:[%s166 + $0x1a0] sm:$0xff]
      %v227 = vld [vmem:[%s166 + $0x1a8] sm:$0xff]
      %v228 = vld [vmem:[%s166 + $0x1b0] sm:$0xff]
      %v229 = vld [vmem:[%s166 + $0x1b8] sm:$0xff]
      %v230 = vld [vmem:[%s166 + $0x1c0] sm:$0xff]
      %v231 = vld [vmem:[%s166 + $0x1c8] sm:$0xff]
      %v232 = vld [vmem:[%s166 + $0x1d0] sm:$0xff]
      %v233 = vld [vmem:[%s166 + $0x1d8] sm:$0xff]
      %v234 = vld [vmem:[%s166 + $0x1e0] sm:$0xff]
      %v235 = vld [vmem:[%s166 + $0x1e8] sm:$0xff]
      %v236 = vld [vmem:[%s166 + $0x1f0] sm:$0xff]
      %v237 = vld [vmem:[%s166 + $0x1f8] sm:$0xff]
      %v238 = vld [vmem:[%s1] sm:$0xff]
      %v239 = vld [vmem:[%s1 + $0x8] sm:$0xff]
      %v240 = vld [vmem:[%s1 + $0x10] sm:$0xff]
      %v241 = vld [vmem:[%s1 + $0x18] sm:$0xff]
      %v242 = vld [vmem:[%s2] sm:$0x1]
      %v244 = vlaneseq
      %v245 = vshrl.u32 %v244, 7
      %v246 = vsub.s32 0, %v245
      %v247 = vrot.slane %v242, %v246
      %vm249 = vcmask 261120
      %v251 = vsel %vm249, %v174, 0
      %v254 = vsel %vm249, %v175, 0
      %v257 = vsel %vm249, %v176, 0
      %v260 = vsel %vm249, %v177, 0
      %v263 = vsel %vm249, %v178, 0
      %v266 = vsel %vm249, %v179, 0
      %v269 = vsel %vm249, %v180, 0
      %v272 = vsel %vm249, %v181, 0
      %v275 = vsel %vm249, %v182, 0
      %v278 = vsel %vm249, %v183, 0
      %v281 = vsel %vm249, %v184, 0
      %v284 = vsel %vm249, %v185, 0
      %v287 = vsel %vm249, %v186, 0
      %v290 = vsel %vm249, %v187, 0
      %v293 = vsel %vm249, %v188, 0
      %v296 = vsel %vm249, %v189, 0
      %v299 = vsel %vm249, %v190, 0
      %v302 = vsel %vm249, %v191, 0
      %v305 = vsel %vm249, %v192, 0
      %v308 = vsel %vm249, %v193, 0
      %v311 = vsel %vm249, %v194, 0
      %v314 = vsel %vm249, %v195, 0
      %v317 = vsel %vm249, %v196, 0
      %v320 = vsel %vm249, %v197, 0
      %v323 = vsel %vm249, %v198, 0
      %v326 = vsel %vm249, %v199, 0
      %v329 = vsel %vm249, %v200, 0
      %v332 = vsel %vm249, %v201, 0
      %v335 = vsel %vm249, %v202, 0
      %v338 = vsel %vm249, %v203, 0
      %v341 = vsel %vm249, %v204, 0
      %v344 = vsel %vm249, %v205, 0
      %v347 = vsel %vm249, %v206, 0
      %v350 = vsel %vm249, %v207, 0
      %v353 = vsel %vm249, %v208, 0
      %v356 = vsel %vm249, %v209, 0
      %v359 = vsel %vm249, %v210, 0
      %v362 = vsel %vm249, %v211, 0
      %v365 = vsel %vm249, %v212, 0
      %v368 = vsel %vm249, %v213, 0
      %v371 = vsel %vm249, %v214, 0
      %v374 = vsel %vm249, %v215, 0
      %v377 = vsel %vm249, %v216, 0
      %v380 = vsel %vm249, %v217, 0
      %v383 = vsel %vm249, %v218, 0
      %v386 = vsel %vm249, %v219, 0
      %v389 = vsel %vm249, %v220, 0
      %v392 = vsel %vm249, %v221, 0
      %v395 = vsel %vm249, %v222, 0
      %v398 = vsel %vm249, %v223, 0
      %v401 = vsel %vm249, %v224, 0
      %v404 = vsel %vm249, %v225, 0
      %v407 = vsel %vm249, %v226, 0
      %v410 = vsel %vm249, %v227, 0
      %v413 = vsel %vm249, %v228, 0
      %v416 = vsel %vm249, %v229, 0
      %v419 = vsel %vm249, %v230, 0
      %v422 = vsel %vm249, %v231, 0
      %v425 = vsel %vm249, %v232, 0
      %v428 = vsel %vm249, %v233, 0
      %v431 = vsel %vm249, %v234, 0
      %v434 = vsel %vm249, %v235, 0
      %v437 = vsel %vm249, %v236, 0
      %v440 = vsel %vm249, %v237, 0
      %v443 = vsel %vm249, %v238, 0
      %v446 = vsel %vm249, %v239, 0
      %v449 = vsel %vm249, %v240, 0
      %v452 = vsel %vm249, %v241, 0
      %454 = vmatprep.subr.mxu0 0.0
      %455 = vmatpush1.xpose.msra.mxu0 %v443
      %456 = vmatprep.subr.mxu0 0.0
      %457 = vmatpush1.xpose.msra.mxu0 %v446
      %458 = vmatprep.subr.mxu0 0.0
      %459 = vmatpush1.xpose.msra.mxu0 %v449
      %460 = vmatprep.subr.mxu0 0.0
      %461 = vmatpush1.xpose.msra.mxu0 %v452
      %462 = vmatprep.subr.mxu0 0.0
      %463 = vmatpush1.xpose.msra.mxu0 0.0
      %464 = vmatprep.subr.mxu0 0.0
      %465 = vmatpush1.xpose.msra.mxu0 0.0
      %466 = vmatprep.subr.mxu0 0.0
      %467 = vmatpush1.xpose.msra.mxu0 0.0
      %468 = vmatprep.subr.mxu0 0.0
      %469 = vmatpush1.xpose.msra.mxu0 0.0
      %470 = vmatprep.subr.mxu0 0.0
      %471 = vmatpush1.xpose.msra.mxu0 0.0
      %472 = vmatprep.subr.mxu0 0.0
      %473 = vmatpush1.xpose.msra.mxu0 0.0
      %474 = vmatprep.subr.mxu0 0.0
      %475 = vmatpush1.xpose.msra.mxu0 0.0
      %476 = vmatprep.subr.mxu0 0.0
      %477 = vmatpush1.xpose.msra.mxu0 0.0
      %478 = vmatprep.subr.mxu0 0.0
      %479 = vmatpush1.xpose.msra.mxu0 0.0
      %480 = vmatprep.subr.mxu0 0.0
      %481 = vmatpush1.xpose.msra.mxu0 0.0
      %482 = vmatprep.subr.mxu0 0.0
      %483 = vmatpush1.xpose.msra.mxu0 0.0
      %484 = vmatprep.subr.mxu0 0.0
      %485 = vmatpush1.xpose.msra.mxu0 0.0
      %486 = vmatprep.subr.mxu0 0.0
      %487 = vmatpush1.xpose.msra.mxu0 0.0
      %488 = vmatprep.subr.mxu0 0.0
      %489 = vmatpush1.xpose.msra.mxu0 0.0
      %490 = vmatprep.subr.mxu0 0.0
      %491 = vmatpush1.xpose.msra.mxu0 0.0
      %492 = vmatprep.subr.mxu0 0.0
      %493 = vmatpush1.xpose.msra.mxu0 0.0
      %494 = vmatprep.subr.mxu0 0.0
      %495 = vmatpush1.xpose.msra.mxu0 0.0
      %496 = vmatprep.subr.mxu0 0.0
      %497 = vmatpush1.xpose.msra.mxu0 0.0
      %498 = vmatprep.subr.mxu0 0.0
      %499 = vmatpush1.xpose.msra.mxu0 0.0
      %500 = vmatprep.subr.mxu0 0.0
      %501 = vmatpush1.xpose.msra.mxu0 0.0
      %502 = vmatprep.subr.mxu0 0.0
      %503 = vmatpush1.xpose.msra.mxu0 0.0
      %504 = vmatprep.subr.mxu0 0.0
      %505 = vmatpush1.xpose.msra.mxu0 0.0
      %506 = vmatprep.subr.mxu0 0.0
      %507 = vmatpush1.xpose.msra.mxu0 0.0
      %508 = vmatprep.subr.mxu0 0.0
      %509 = vmatpush1.xpose.msra.mxu0 0.0
      %510 = vmatprep.subr.mxu0 0.0
      %511 = vmatpush1.xpose.msra.mxu0 0.0
      %512 = vmatprep.subr.mxu0 0.0
      %513 = vmatpush1.xpose.msra.mxu0 0.0
      %514 = vmatprep.subr.mxu0 0.0
      %515 = vmatpush1.xpose.msra.mxu0 0.0
      %516 = vmatprep.subr.mxu0 0.0
      %517 = vmatpush1.xpose.msra.mxu0 0.0
      %518 = vmatprep.mubr.f32.mxu0 0.0
      %519 = vmatmul.mubr.f32.gmra.mrb[0].mxu0 %v251
      %v520 = vpop.f32.mrb[0].mxu0
      %v521 = vadd.f32 %v247, %v520
      %v522 = vpop.f32.mrb[0].mxu0
      %523 = vmatprep.mubr.f32.mxu0 0.0
      %524 = vmatmul.mubr.f32.gmra.mrb[0].mxu0 %v254
      %v525 = vpop.f32.mrb[0].mxu0
      %v526 = vadd.f32 %v247, %v525
      %v527 = vpop.f32.mrb[0].mxu0
      %528 = vmatprep.mubr.f32.mxu0 0.0
      %529 = vmatmul.mubr.f32.gmra.mrb[0].mxu0 %v257
      %v530 = vpop.f32.mrb[0].mxu0
      %v531 = vadd.f32 %v247, %v530
      %v532 = vpop.f32.mrb[0].mxu0
      %533 = vmatprep.mubr.f32.mxu0 0.0
      %534 = vmatmul.mubr.f32.gmra.mrb[0].mxu0 %v260
      %v535 = vpop.f32.mrb[0].mxu0
      %v536 = vadd.f32 %v247, %v535
      %v537 = vpop.f32.mrb[0].mxu0
      %538 = vmatprep.mubr.f32.mxu0 0.0
      %539 = vmatmul.mubr.f32.gmra.mrb[0].mxu0 %v263
      %v540 = vpop.f32.mrb[0].mxu0
      %v541 = vadd.f32 %v247, %v540
      %v542 = vpop.f32.mrb[0].mxu0
      %543 = vmatprep.mubr.f32.mxu0 0.0
      %544 = vmatmul.mubr.f32.gmra.mrb[0].mxu0 %v266
      %v545 = vpop.f32.mrb[0].mxu0
      %v546 = vadd.f32 %v247, %v545
      %v547 = vpop.f32.mrb[0].mxu0
      %548 = vmatprep.mubr.f32.mxu0 0.0
      %549 = vmatmul.mubr.f32.gmra.mrb[0].mxu0 %v269
      %v550 = vpop.f32.mrb[0].mxu0
      %v551 = vadd.f32 %v247, %v550
      %v552 = vpop.f32.mrb[0].mxu0
      %553 = vmatprep.mubr.f32.mxu0 0.0
      %554 = vmatmul.mubr.f32.gmra.mrb[0].mxu0 %v272
      %v555 = vpop.f32.mrb[0].mxu0
      %v556 = vadd.f32 %v247, %v555
      %v557 = vpop.f32.mrb[0].mxu0
      %558 = vmatprep.mubr.f32.mxu0 0.0
      %559 = vmatmul.mubr.f32.gmra.mrb[0].mxu0 %v275
      %v560 = vpop.f32.mrb[0].mxu0
      %v561 = vadd.f32 %v247, %v560
      %v562 = vpop.f32.mrb[0].mxu0
      %563 = vmatprep.mubr.f32.mxu0 0.0
      %564 = vmatmul.mubr.f32.gmra.mrb[0].mxu0 %v278
      %v565 = vpop.f32.mrb[0].mxu0
      %v566 = vadd.f32 %v247, %v565
      %v567 = vpop.f32.mrb[0].mxu0
      %568 = vmatprep.mubr.f32.mxu0 0.0
      %569 = vmatmul.mubr.f32.gmra.mrb[0].mxu0 %v281
      %v570 = vpop.f32.mrb[0].mxu0
      %v571 = vadd.f32 %v247, %v570
      %v572 = vpop.f32.mrb[0].mxu0
      %573 = vmatprep.mubr.f32.mxu0 0.0
      %574 = vmatmul.mubr.f32.gmra.mrb[0].mxu0 %v284
      %v575 = vpop.f32.mrb[0].mxu0
      %v576 = vadd.f32 %v247, %v575
      %v577 = vpop.f32.mrb[0].mxu0
      %578 = vmatprep.mubr.f32.mxu0 0.0
      %579 = vmatmul.mubr.f32.gmra.mrb[0].mxu0 %v287
      %v580 = vpop.f32.mrb[0].mxu0
      %v581 = vadd.f32 %v247, %v580
      %v582 = vpop.f32.mrb[0].mxu0
      %583 = vmatprep.mubr.f32.mxu0 0.0
      %584 = vmatmul.mubr.f32.gmra.mrb[0].mxu0 %v290
      %v585 = vpop.f32.mrb[0].mxu0
      %v586 = vadd.f32 %v247, %v585
      %v587 = vpop.f32.mrb[0].mxu0
      %588 = vmatprep.mubr.f32.mxu0 0.0
      %589 = vmatmul.mubr.f32.gmra.mrb[0].mxu0 %v293
      %v590 = vpop.f32.mrb[0].mxu0
      %v591 = vadd.f32 %v247, %v590
      %v592 = vpop.f32.mrb[0].mxu0
      %593 = vmatprep.mubr.f32.mxu0 0.0
      %594 = vmatmul.mubr.f32.gmra.mrb[0].mxu0 %v296
      %v595 = vpop.f32.mrb[0].mxu0
      %v596 = vadd.f32 %v247, %v595
      %v597 = vpop.f32.mrb[0].mxu0
      %598 = vmatprep.mubr.f32.mxu0 0.0
      %599 = vmatmul.mubr.f32.gmra.mrb[0].mxu0 %v299
      %v600 = vpop.f32.mrb[0].mxu0
      %v601 = vadd.f32 %v247, %v600
      %v602 = vpop.f32.mrb[0].mxu0
      %603 = vmatprep.mubr.f32.mxu0 0.0
      %604 = vmatmul.mubr.f32.gmra.mrb[0].mxu0 %v302
      %v605 = vpop.f32.mrb[0].mxu0
      %v606 = vadd.f32 %v247, %v605
      %v607 = vpop.f32.mrb[0].mxu0
      %608 = vmatprep.mubr.f32.mxu0 0.0
      %609 = vmatmul.mubr.f32.gmra.mrb[0].mxu0 %v305
      %v610 = vpop.f32.mrb[0].mxu0
      %v611 = vadd.f32 %v247, %v610
      %v612 = vpop.f32.mrb[0].mxu0
      %613 = vmatprep.mubr.f32.mxu0 0.0
      %614 = vmatmul.mubr.f32.gmra.mrb[0].mxu0 %v308
      %v615 = vpop.f32.mrb[0].mxu0
      %v616 = vadd.f32 %v247, %v615
      %v617 = vpop.f32.mrb[0].mxu0
      %618 = vmatprep.mubr.f32.mxu0 0.0
      %619 = vmatmul.mubr.f32.gmra.mrb[0].mxu0 %v311
      %v620 = vpop.f32.mrb[0].mxu0
      %v621 = vadd.f32 %v247, %v620
      %v622 = vpop.f32.mrb[0].mxu0
      %623 = vmatprep.mubr.f32.mxu0 0.0
      %624 = vmatmul.mubr.f32.gmra.mrb[0].mxu0 %v314
      %v625 = vpop.f32.mrb[0].mxu0
      %v626 = vadd.f32 %v247, %v625
      %v627 = vpop.f32.mrb[0].mxu0
      %628 = vmatprep.mubr.f32.mxu0 0.0
      %629 = vmatmul.mubr.f32.gmra.mrb[0].mxu0 %v317
      %v630 = vpop.f32.mrb[0].mxu0
      %v631 = vadd.f32 %v247, %v630
      %v632 = vpop.f32.mrb[0].mxu0
      %633 = vmatprep.mubr.f32.mxu0 0.0
      %634 = vmatmul.mubr.f32.gmra.mrb[0].mxu0 %v320
      %v635 = vpop.f32.mrb[0].mxu0
      %v636 = vadd.f32 %v247, %v635
      %v637 = vpop.f32.mrb[0].mxu0
      %638 = vmatprep.mubr.f32.mxu0 0.0
      %639 = vmatmul.mubr.f32.gmra.mrb[0].mxu0 %v323
      %v640 = vpop.f32.mrb[0].mxu0
      %v641 = vadd.f32 %v247, %v640
      %v642 = vpop.f32.mrb[0].mxu0
      %643 = vmatprep.mubr.f32.mxu0 0.0
      %644 = vmatmul.mubr.f32.gmra.mrb[0].mxu0 %v326
      %v645 = vpop.f32.mrb[0].mxu0
      %v646 = vadd.f32 %v247, %v645
      %v647 = vpop.f32.mrb[0].mxu0
      %648 = vmatprep.mubr.f32.mxu0 0.0
      %649 = vmatmul.mubr.f32.gmra.mrb[0].mxu0 %v329
      %v650 = vpop.f32.mrb[0].mxu0
      %v651 = vadd.f32 %v247, %v650
      %v652 = vpop.f32.mrb[0].mxu0
      %653 = vmatprep.mubr.f32.mxu0 0.0
      %654 = vmatmul.mubr.f32.gmra.mrb[0].mxu0 %v332
      %v655 = vpop.f32.mrb[0].mxu0
      %v656 = vadd.f32 %v247, %v655
      %v657 = vpop.f32.mrb[0].mxu0
      %658 = vmatprep.mubr.f32.mxu0 0.0
      %659 = vmatmul.mubr.f32.gmra.mrb[0].mxu0 %v335
      %v660 = vpop.f32.mrb[0].mxu0
      %v661 = vadd.f32 %v247, %v660
      %v662 = vpop.f32.mrb[0].mxu0
      %663 = vmatprep.mubr.f32.mxu0 0.0
      %664 = vmatmul.mubr.f32.gmra.mrb[0].mxu0 %v338
      %v665 = vpop.f32.mrb[0].mxu0
      %v666 = vadd.f32 %v247, %v665
      %v667 = vpop.f32.mrb[0].mxu0
      %668 = vmatprep.mubr.f32.mxu0 0.0
      %669 = vmatmul.mubr.f32.gmra.mrb[0].mxu0 %v341
      %v670 = vpop.f32.mrb[0].mxu0
      %v671 = vadd.f32 %v247, %v670
      %v672 = vpop.f32.mrb[0].mxu0
      %673 = vmatprep.mubr.f32.mxu0 0.0
      %674 = vmatmul.mubr.f32.gmra.mrb[0].mxu0 %v344
      %v675 = vpop.f32.mrb[0].mxu0
      %v676 = vadd.f32 %v247, %v675
      %v677 = vpop.f32.mrb[0].mxu0
      %678 = vmatprep.mubr.f32.mxu0 0.0
      %679 = vmatmul.mubr.f32.gmra.mrb[0].mxu0 %v347
      %v680 = vpop.f32.mrb[0].mxu0
      %v681 = vadd.f32 %v247, %v680
      %v682 = vpop.f32.mrb[0].mxu0
      %683 = vmatprep.mubr.f32.mxu0 0.0
      %684 = vmatmul.mubr.f32.gmra.mrb[0].mxu0 %v350
      %v685 = vpop.f32.mrb[0].mxu0
      %v686 = vadd.f32 %v247, %v685
      %v687 = vpop.f32.mrb[0].mxu0
      %688 = vmatprep.mubr.f32.mxu0 0.0
      %689 = vmatmul.mubr.f32.gmra.mrb[0].mxu0 %v353
      %v690 = vpop.f32.mrb[0].mxu0
      %v691 = vadd.f32 %v247, %v690
      %v692 = vpop.f32.mrb[0].mxu0
      %693 = vmatprep.mubr.f32.mxu0 0.0
      %694 = vmatmul.mubr.f32.gmra.mrb[0].mxu0 %v356
      %v695 = vpop.f32.mrb[0].mxu0
      %v696 = vadd.f32 %v247, %v695
      %v697 = vpop.f32.mrb[0].mxu0
      %698 = vmatprep.mubr.f32.mxu0 0.0
      %699 = vmatmul.mubr.f32.gmra.mrb[0].mxu0 %v359
      %v700 = vpop.f32.mrb[0].mxu0
      %v701 = vadd.f32 %v247, %v700
      %v702 = vpop.f32.mrb[0].mxu0
      %703 = vmatprep.mubr.f32.mxu0 0.0
      %704 = vmatmul.mubr.f32.gmra.mrb[0].mxu0 %v362
      %v705 = vpop.f32.mrb[0].mxu0
      %v706 = vadd.f32 %v247, %v705
      %v707 = vpop.f32.mrb[0].mxu0
      %708 = vmatprep.mubr.f32.mxu0 0.0
      %709 = vmatmul.mubr.f32.gmra.mrb[0].mxu0 %v365
      %v710 = vpop.f32.mrb[0].mxu0
      %v711 = vadd.f32 %v247, %v710
      %v712 = vpop.f32.mrb[0].mxu0
      %713 = vmatprep.mubr.f32.mxu0 0.0
      %714 = vmatmul.mubr.f32.gmra.mrb[0].mxu0 %v368
      %v715 = vpop.f32.mrb[0].mxu0
      %v716 = vadd.f32 %v247, %v715
      %v717 = vpop.f32.mrb[0].mxu0
      %718 = vmatprep.mubr.f32.mxu0 0.0
      %719 = vmatmul.mubr.f32.gmra.mrb[0].mxu0 %v371
      %v720 = vpop.f32.mrb[0].mxu0
      %v721 = vadd.f32 %v247, %v720
      %v722 = vpop.f32.mrb[0].mxu0
      %723 = vmatprep.mubr.f32.mxu0 0.0
      %724 = vmatmul.mubr.f32.gmra.mrb[0].mxu0 %v374
      %v725 = vpop.f32.mrb[0].mxu0
      %v726 = vadd.f32 %v247, %v725
      %v727 = vpop.f32.mrb[0].mxu0
      %728 = vmatprep.mubr.f32.mxu0 0.0
      %729 = vmatmul.mubr.f32.gmra.mrb[0].mxu0 %v377
      %v730 = vpop.f32.mrb[0].mxu0
      %v731 = vadd.f32 %v247, %v730
      %v732 = vpop.f32.mrb[0].mxu0
      %733 = vmatprep.mubr.f32.mxu0 0.0
      %734 = vmatmul.mubr.f32.gmra.mrb[0].mxu0 %v380
      %v735 = vpop.f32.mrb[0].mxu0
      %v736 = vadd.f32 %v247, %v735
      %v737 = vpop.f32.mrb[0].mxu0
      %738 = vmatprep.mubr.f32.mxu0 0.0
      %739 = vmatmul.mubr.f32.gmra.mrb[0].mxu0 %v383
      %v740 = vpop.f32.mrb[0].mxu0
      %v741 = vadd.f32 %v247, %v740
      %v742 = vpop.f32.mrb[0].mxu0
      %743 = vmatprep.mubr.f32.mxu0 0.0
      %744 = vmatmul.mubr.f32.gmra.mrb[0].mxu0 %v386
      %v745 = vpop.f32.mrb[0].mxu0
      %v746 = vadd.f32 %v247, %v745
      %v747 = vpop.f32.mrb[0].mxu0
      %748 = vmatprep.mubr.f32.mxu0 0.0
      %749 = vmatmul.mubr.f32.gmra.mrb[0].mxu0 %v389
      %v750 = vpop.f32.mrb[0].mxu0
      %v751 = vadd.f32 %v247, %v750
      %v752 = vpop.f32.mrb[0].mxu0
      %753 = vmatprep.mubr.f32.mxu0 0.0
      %754 = vmatmul.mubr.f32.gmra.mrb[0].mxu0 %v392
      %v755 = vpop.f32.mrb[0].mxu0
      %v756 = vadd.f32 %v247, %v755
      %v757 = vpop.f32.mrb[0].mxu0
      %758 = vmatprep.mubr.f32.mxu0 0.0
      %759 = vmatmul.mubr.f32.gmra.mrb[0].mxu0 %v395
      %v760 = vpop.f32.mrb[0].mxu0
      %v761 = vadd.f32 %v247, %v760
      %v762 = vpop.f32.mrb[0].mxu0
      %763 = vmatprep.mubr.f32.mxu0 0.0
      %764 = vmatmul.mubr.f32.gmra.mrb[0].mxu0 %v398
      %v765 = vpop.f32.mrb[0].mxu0
      %v766 = vadd.f32 %v247, %v765
      %v767 = vpop.f32.mrb[0].mxu0
      %768 = vmatprep.mubr.f32.mxu0 0.0
      %769 = vmatmul.mubr.f32.gmra.mrb[0].mxu0 %v401
      %v770 = vpop.f32.mrb[0].mxu0
      %v771 = vadd.f32 %v247, %v770
      %v772 = vpop.f32.mrb[0].mxu0
      %773 = vmatprep.mubr.f32.mxu0 0.0
      %774 = vmatmul.mubr.f32.gmra.mrb[0].mxu0 %v404
      %v775 = vpop.f32.mrb[0].mxu0
      %v776 = vadd.f32 %v247, %v775
      %v777 = vpop.f32.mrb[0].mxu0
      %778 = vmatprep.mubr.f32.mxu0 0.0
      %779 = vmatmul.mubr.f32.gmra.mrb[0].mxu0 %v407
      %v780 = vpop.f32.mrb[0].mxu0
      %v781 = vadd.f32 %v247, %v780
      %v782 = vpop.f32.mrb[0].mxu0
      %783 = vmatprep.mubr.f32.mxu0 0.0
      %784 = vmatmul.mubr.f32.gmra.mrb[0].mxu0 %v410
      %v785 = vpop.f32.mrb[0].mxu0
      %v786 = vadd.f32 %v247, %v785
      %v787 = vpop.f32.mrb[0].mxu0
      %788 = vmatprep.mubr.f32.mxu0 0.0
      %789 = vmatmul.mubr.f32.gmra.mrb[0].mxu0 %v413
      %v790 = vpop.f32.mrb[0].mxu0
      %v791 = vadd.f32 %v247, %v790
      %v792 = vpop.f32.mrb[0].mxu0
      %793 = vmatprep.mubr.f32.mxu0 0.0
      %794 = vmatmul.mubr.f32.gmra.mrb[0].mxu0 %v416
      %v795 = vpop.f32.mrb[0].mxu0
      %v796 = vadd.f32 %v247, %v795
      %v797 = vpop.f32.mrb[0].mxu0
      %798 = vmatprep.mubr.f32.mxu0 0.0
      %799 = vmatmul.mubr.f32.gmra.mrb[0].mxu0 %v419
      %v800 = vpop.f32.mrb[0].mxu0
      %v801 = vadd.f32 %v247, %v800
      %v802 = vpop.f32.mrb[0].mxu0
      %803 = vmatprep.mubr.f32.mxu0 0.0
      %804 = vmatmul.mubr.f32.gmra.mrb[0].mxu0 %v422
      %v805 = vpop.f32.mrb[0].mxu0
      %v806 = vadd.f32 %v247, %v805
      %v807 = vpop.f32.mrb[0].mxu0
      %808 = vmatprep.mubr.f32.mxu0 0.0
      %809 = vmatmul.mubr.f32.gmra.mrb[0].mxu0 %v425
      %v810 = vpop.f32.mrb[0].mxu0
      %v811 = vadd.f32 %v247, %v810
      %v812 = vpop.f32.mrb[0].mxu0
      %813 = vmatprep.mubr.f32.mxu0 0.0
      %814 = vmatmul.mubr.f32.gmra.mrb[0].mxu0 %v428
      %v815 = vpop.f32.mrb[0].mxu0
      %v816 = vadd.f32 %v247, %v815
      %v817 = vpop.f32.mrb[0].mxu0
      %818 = vmatprep.mubr.f32.mxu0 0.0
      %819 = vmatmul.mubr.f32.gmra.mrb[0].mxu0 %v431
      %v820 = vpop.f32.mrb[0].mxu0
      %v821 = vadd.f32 %v247, %v820
      %v822 = vpop.f32.mrb[0].mxu0
      %823 = vmatprep.mubr.f32.mxu0 0.0
      %824 = vmatmul.mubr.f32.gmra.mrb[0].mxu0 %v434
      %v825 = vpop.f32.mrb[0].mxu0
      %v826 = vadd.f32 %v247, %v825
      %v827 = vpop.f32.mrb[0].mxu0
      %828 = vmatprep.mubr.f32.mxu0 0.0
      %829 = vmatmul.mubr.f32.gmra.mrb[0].mxu0 %v437
      %v830 = vpop.f32.mrb[0].mxu0
      %v831 = vadd.f32 %v247, %v830
      %v832 = vpop.f32.mrb[0].mxu0
      %833 = vmatprep.mubr.f32.mxu0 0.0
      %834 = vmatmul.mubr.f32.gmra.mrb[0].mxu0 %v440
      %v835 = vpop.f32.mrb[0].mxu0
      %v836 = vadd.f32 %v247, %v835
      %v837 = vpop.f32.mrb[0].mxu0
      %838 = vdwg.mxu0
      %839 = vst.msk [vmem:[%s172] sm:$0xff] %vm249, %v521
      %840 = vst.msk [vmem:[%s172 + $0x8] sm:$0xff] %vm249, %v526
      %841 = vst.msk [vmem:[%s172 + $0x10] sm:$0xff] %vm249, %v531
      %842 = vst.msk [vmem:[%s172 + $0x18] sm:$0xff] %vm249, %v536
      %843 = vst.msk [vmem:[%s172 + $0x20] sm:$0xff] %vm249, %v541
      %844 = vst.msk [vmem:[%s172 + $0x28] sm:$0xff] %vm249, %v546
      %845 = vst.msk [vmem:[%s172 + $0x30] sm:$0xff] %vm249, %v551
      %846 = vst.msk [vmem:[%s172 + $0x38] sm:$0xff] %vm249, %v556
      %847 = vst.msk [vmem:[%s172 + $0x40] sm:$0xff] %vm249, %v561
      %848 = vst.msk [vmem:[%s172 + $0x48] sm:$0xff] %vm249, %v566
      %849 = vst.msk [vmem:[%s172 + $0x50] sm:$0xff] %vm249, %v571
      %850 = vst.msk [vmem:[%s172 + $0x58] sm:$0xff] %vm249, %v576
      %851 = vst.msk [vmem:[%s172 + $0x60] sm:$0xff] %vm249, %v581
      %852 = vst.msk [vmem:[%s172 + $0x68] sm:$0xff] %vm249, %v586
      %853 = vst.msk [vmem:[%s172 + $0x70] sm:$0xff] %vm249, %v591
      %854 = vst.msk [vmem:[%s172 + $0x78] sm:$0xff] %vm249, %v596
      %855 = vst.msk [vmem:[%s172 + $0x80] sm:$0xff] %vm249, %v601
      %856 = vst.msk [vmem:[%s172 + $0x88] sm:$0xff] %vm249, %v606
      %857 = vst.msk [vmem:[%s172 + $0x90] sm:$0xff] %vm249, %v611
      %858 = vst.msk [vmem:[%s172 + $0x98] sm:$0xff] %vm249, %v616
      %859 = vst.msk [vmem:[%s172 + $0xa0] sm:$0xff] %vm249, %v621
      %860 = vst.msk [vmem:[%s172 + $0xa8] sm:$0xff] %vm249, %v626
      %861 = vst.msk [vmem:[%s172 + $0xb0] sm:$0xff] %vm249, %v631
      %862 = vst.msk [vmem:[%s172 + $0xb8] sm:$0xff] %vm249, %v636
      %863 = vst.msk [vmem:[%s172 + $0xc0] sm:$0xff] %vm249, %v641
      %864 = vst.msk [vmem:[%s172 + $0xc8] sm:$0xff] %vm249, %v646
      %865 = vst.msk [vmem:[%s172 + $0xd0] sm:$0xff] %vm249, %v651
      %866 = vst.msk [vmem:[%s172 + $0xd8] sm:$0xff] %vm249, %v656
      %867 = vst.msk [vmem:[%s172 + $0xe0] sm:$0xff] %vm249, %v661
      %868 = vst.msk [vmem:[%s172 + $0xe8] sm:$0xff] %vm249, %v666
      %869 = vst.msk [vmem:[%s172 + $0xf0] sm:$0xff] %vm249, %v671
      %870 = vst.msk [vmem:[%s172 + $0xf8] sm:$0xff] %vm249, %v676
      %871 = vst.msk [vmem:[%s172 + $0x100] sm:$0xff] %vm249, %v681
      %872 = vst.msk [vmem:[%s172 + $0x108] sm:$0xff] %vm249, %v686
      %873 = vst.msk [vmem:[%s172 + $0x110] sm:$0xff] %vm249, %v691
      %874 = vst.msk [vmem:[%s172 + $0x118] sm:$0xff] %vm249, %v696
      %875 = vst.msk [vmem:[%s172 + $0x120] sm:$0xff] %vm249, %v701
      %876 = vst.msk [vmem:[%s172 + $0x128] sm:$0xff] %vm249, %v706
      %877 = vst.msk [vmem:[%s172 + $0x130] sm:$0xff] %vm249, %v711
      %878 = vst.msk [vmem:[%s172 + $0x138] sm:$0xff] %vm249, %v716
      %879 = vst.msk [vmem:[%s172 + $0x140] sm:$0xff] %vm249, %v721
      %880 = vst.msk [vmem:[%s172 + $0x148] sm:$0xff] %vm249, %v726
      %881 = vst.msk [vmem:[%s172 + $0x150] sm:$0xff] %vm249, %v731
      %882 = vst.msk [vmem:[%s172 + $0x158] sm:$0xff] %vm249, %v736
      %883 = vst.msk [vmem:[%s172 + $0x160] sm:$0xff] %vm249, %v741
      %884 = vst.msk [vmem:[%s172 + $0x168] sm:$0xff] %vm249, %v746
      %885 = vst.msk [vmem:[%s172 + $0x170] sm:$0xff] %vm249, %v751
      %886 = vst.msk [vmem:[%s172 + $0x178] sm:$0xff] %vm249, %v756
      %887 = vst.msk [vmem:[%s172 + $0x180] sm:$0xff] %vm249, %v761
      %888 = vst.msk [vmem:[%s172 + $0x188] sm:$0xff] %vm249, %v766
      %889 = vst.msk [vmem:[%s172 + $0x190] sm:$0xff] %vm249, %v771
      %890 = vst.msk [vmem:[%s172 + $0x198] sm:$0xff] %vm249, %v776
      %891 = vst.msk [vmem:[%s172 + $0x1a0] sm:$0xff] %vm249, %v781
      %892 = vst.msk [vmem:[%s172 + $0x1a8] sm:$0xff] %vm249, %v786
      %893 = vst.msk [vmem:[%s172 + $0x1b0] sm:$0xff] %vm249, %v791
      %894 = vst.msk [vmem:[%s172 + $0x1b8] sm:$0xff] %vm249, %v796
      %895 = vst.msk [vmem:[%s172 + $0x1c0] sm:$0xff] %vm249, %v801
      %896 = vst.msk [vmem:[%s172 + $0x1c8] sm:$0xff] %vm249, %v806
      %897 = vst.msk [vmem:[%s172 + $0x1d0] sm:$0xff] %vm249, %v811
      %898 = vst.msk [vmem:[%s172 + $0x1d8] sm:$0xff] %vm249, %v816
      %899 = vst.msk [vmem:[%s172 + $0x1e0] sm:$0xff] %vm249, %v821
      %900 = vst.msk [vmem:[%s172 + $0x1e8] sm:$0xff] %vm249, %v826
      %901 = vst.msk [vmem:[%s172 + $0x1f0] sm:$0xff] %vm249, %v831
      %902 = vst.msk [vmem:[%s172 + $0x1f8] sm:$0xff] %vm249, %v836
      %s903 = smul.u32 64, %s14
      %p904 = scmp.lt.s32.totalorder %s903, 127
      %s905 = scalar_select %p904, %s903, 127
      %s906 = smul.addr %s905, 8
      %s907 = scalar_lea.vmem %s3, %s906
      // Predicated region
      $region33: #{tpu_custom_call.1} parent=31 // pred_check
        %p908 = pneg %p100
      $region34: #{tpu_custom_call.1} parent=31 // pred_check_branch
        %910 = sbr.rel (%p908) target = $region36
      $region35: #{tpu_custom_call.1} parent=31 // pred_region
        %s911 = smul.u32 64, %s14
      $region36: #{tpu_custom_call.1} parent=31 // pred_fallthru
        _
    $region32: #{tpu_custom_call.1} parent=5 // pred_fallthru
      _
    %p912 = scmp.le.s32.totalorder 2, %s9
    // Predicated region
    $region37: #{tpu_custom_call.1} parent=5 // pred_check
      %p913 = pneg %p912
    $region38: #{tpu_custom_call.1} parent=5 // pred_check_branch
      %915 = sbr.rel (%p913) target = $region40
    $region39: #{tpu_custom_call.1} parent=5 // pred_region
      %s916 = ssub.s32 %s9, 2
      // Predicated region
      $region41: #{tpu_custom_call.1} parent=39 // pred_check
        %p917 = pneg %p106
      $region42: #{tpu_custom_call.1} parent=39 // pred_check_branch
        %919 = sbr.rel (%p917) target = $region44
      $region43: #{tpu_custom_call.1} parent=39 // pred_region
        %s920 = smul.u32 64, %s15
        %p921 = scmp.lt.s32.totalorder %s920, 127
        %s922 = scalar_select %p921, %s920, 127
        %s923 = smul.addr %s922, 8
        %s924 = scalar_lea.vmem %s3, %s923
      $region44: #{tpu_custom_call.1} parent=39 // pred_fallthru
        _
    $region40: #{tpu_custom_call.1} parent=5 // pred_fallthru
      _
  $region6: #{tpu_custom_call.1} parent=0 // loop_footer
    %s13 = sadd.s32 1, %s9
  $region7: #{tpu_custom_call.1} parent=0 // loop_footer_branch
    %8 = sbr.rel target = $region3
  $region8: #{tpu_custom_call.1} parent=0 // loop_exit
    _

</llo_original>
